<compile_context>
chip_gen: v7x
topology: tpu7x:2x2x1
jax: 0.10.0
libtpu: 0.0.40
codegen_flags: <defaults>
</compile_context>

<pallas_src>
import jax
import jax.numpy as jnp
from jax.experimental import pallas as pl
from jax.experimental.pallas import tpu as pltpu


_LANE = 128
_SUBLANE = 8


def _round_up(n, m):
    return ((n + m - 1) // m) * m


def _cdiv(a, b):
    return (a + b - 1) // b


def mlp_kernel(x_ref, w1_ref, b1_ref, w2_ref, b2_ref, o_ref):
    # Layer 1 on the MXU (native bf16 path), f32 accumulation.
    h = jnp.dot(x_ref[...], w1_ref[...], preferred_element_type=jnp.float32)
    h = jnp.maximum(h + b1_ref[...], 0.0)              # (tb, Hp): bias + ReLU (VPU, f32)
    # TODO(synk): nn.Dropout(0.5) is identity in eval mode; training-mode RNG
    # masking (pltpu.prng_*) is not reproduced here.
    #
    # Layer 2 (out_features == 1), lane-dense epilogue:
    #   VPU multiply by the w2 row, XLU transpose of the tile, sublane reduce
    #   to a (1, tb) row -> sigmoid (EUP) and the store path touch ~16x fewer
    #   vregs than a (tb, 1) column would, and the out_spec is lane-dense.
    t = h * w2_ref[...]                                 # (tb, Hp) * (1, Hp)
    y = jnp.sum(t.T, axis=0, keepdims=True)             # (Hp, tb) -> (1, tb)
    y = y + b2_ref[0, 0]                                 # SMEM scalar bias
    o_ref[...] = jax.nn.sigmoid(y)                       # lane-dense EUP + store


def prepare_params(matrix_dim, w1, b1, w2, b2):
    """Pack the F-based Linear params into lane-aligned kernel operands.

    w1: (F, H)  (already transposed from torch's (H, F))
    b1: (H,)    w2: (H, 1)    b2: (1,)
    Returns (w1_full (K, Hp) bf16, b1_pad (1, Hp) f32, w2_row (1, Hp) f32,
             b2_s (1, 1) f32), where K = D*D and Hp = round_up(H, 128).
    """
    D = matrix_dim
    K = D * D
    F, H = w1.shape
    Hp = _round_up(H, _LANE)

    iu_r, iu_c = jnp.triu_indices(D)
    flat_idx = iu_r * D + iu_c                  # row-major triu positions (F,)

    w1_full = jnp.zeros((K, Hp), jnp.bfloat16).at[flat_idx, :H].set(
        w1.astype(jnp.bfloat16))
    b1_pad = jnp.zeros((1, Hp), jnp.float32).at[0, :H].set(
        b1.reshape(-1).astype(jnp.float32))
    w2_row = jnp.zeros((1, Hp), jnp.float32).at[0, :H].set(
        w2.reshape(-1).astype(jnp.float32))
    b2_s = jnp.asarray(b2, jnp.float32).reshape(1, 1)
    return w1_full, b1_pad, w2_row, b2_s


def _pick_batch_tile(Bp, K, Hp, block_b):
    """Batch tile: multiple of 128, <= Bp, VMEM-capped, >= 2 grid steps."""
    block_b = max(_LANE, (block_b // _LANE) * _LANE)
    # Per-step working set: 2x double-buffered bf16 x block + f32 h / h*w2 /
    # transpose intermediates.  Keep it under ~12 MiB so the kernel fits v5e's
    # 16 MiB scoped-VMEM default (and never approaches v7x's 64 MiB physical).
    bytes_per_row = 2 * (K * 2) + 3 * (Hp * 4)
    vmem_cap = max(_LANE, ((12 << 20) // bytes_per_row) // _LANE * _LANE)
    tb = min(block_b, (Bp // _LANE) * _LANE, vmem_cap)
    if Bp >= 2 * _LANE:
        # >= 2 grid steps so the "parallel" axis can shard across v7x's 2 TCs.
        tb = min(tb, max(_LANE, _round_up(_cdiv(Bp, 2), _LANE)))
    return max(_LANE, tb)


def mlp_forward(sim_matrices, w1_full, b1_pad, w2_row, b2_s, *, block_b=2048):
    B, D, D2 = sim_matrices.shape
    assert D == D2
    K = D * D
    Hp = w1_full.shape[1]
    assert w1_full.shape == (K, Hp)

    # No gather: the triu selection lives in w1_full's zero rows.  bf16 halves
    # the streamed HBM traffic and feeds the native bf16 MXU.
    x = sim_matrices.reshape(B, K).astype(jnp.bfloat16)

    # Only tiny batches get padded up to one 128-row tile; larger batches
    # stream with a partial edge block instead of a full-tensor jnp.pad copy.
    Bp = max(B, _LANE)
    if Bp != B:
        x = jnp.pad(x, ((0, Bp - B), (0, 0)))

    tb = _pick_batch_tile(Bp, K, Hp, block_b)
    nb = _cdiv(Bp, tb)

    cost = pl.CostEstimate(
        flops=2 * Bp * K * Hp + 4 * Bp * Hp,
        transcendentals=Bp,
        bytes_accessed=Bp * K * 2 + K * Hp * 2 + 3 * Hp * 4 + nb * tb * 4,
    )

    out = pl.pallas_call(
        mlp_kernel,
        out_shape=jax.ShapeDtypeStruct((nb, tb), jnp.float32),
        grid=(nb,),
        in_specs=[
            pl.BlockSpec((tb, K), lambda i: (i, 0)),            # streamed x
            pl.BlockSpec((K, Hp), lambda i: (0, 0)),            # resident W1
            pl.BlockSpec((1, Hp), lambda i: (0, 0)),            # resident b1
            pl.BlockSpec((1, Hp), lambda i: (0, 0)),            # resident w2 row
            pl.BlockSpec(memory_space=pltpu.MemorySpace.SMEM),  # b2 scalar
        ],
        out_specs=pl.BlockSpec((1, tb), lambda i: (i, 0)),      # lane-dense rows
        compiler_params=pltpu.CompilerParams(
            dimension_semantics=("parallel",),
        ),
        cost_estimate=cost,
    )(x, w1_full, b1_pad, w2_row, b2_s)

    # Row i of `out` holds batch elements [i*tb, (i+1)*tb) along lanes; the
    # tail of the last row (padding / edge-block garbage) is trimmed here.
    return out.reshape(-1)[:B].reshape(B, 1)


def init_params(key, matrix_dim, layer_size_factor=(1, 5)):
    """Deterministic synthetic init (shapes match the PyTorch module)."""
    F = matrix_dim * (matrix_dim + 1) // 2          # triu_indices count
    in0 = F // layer_size_factor[0]
    h = F // layer_size_factor[1]
    k1, k2, k3, k4 = jax.random.split(key, 4)
    # stored as (in, out) == transpose of torch Linear.weight
    w1 = jax.random.normal(k1, (in0, h), jnp.float32) * (1.0 / jnp.sqrt(in0))
    b1 = jax.random.normal(k2, (h,), jnp.float32) * 0.01
    w2 = jax.random.normal(k3, (h, 1), jnp.float32) * (1.0 / jnp.sqrt(h))
    b2 = jax.random.normal(k4, (1,), jnp.float32) * 0.01
    return w1, b1, w2, b2


def mlp_reference(sim_matrices, w1, b1, w2, b2):
    """Pure-JAX f32 reference mirroring the PyTorch forward (eval mode)."""
    D = sim_matrices.shape[1]
    iu_r, iu_c = jnp.triu_indices(D)
    x = sim_matrices[:, iu_r, iu_c].astype(jnp.float32)
    h = jnp.maximum(x @ w1 + b1[None, :], 0.0)
    return jax.nn.sigmoid(h @ w2 + b2[None, :])


if __name__ == "__main__":
    matrix_dim = 16       # D  -> F = 136, H = 27 (Hp = 128), K = 256
    batch = 4             # B
    key = jax.random.PRNGKey(0)
    k_x, k_p = jax.random.split(key)

    sim_matrices = jax.random.normal(
        k_x, (batch, matrix_dim, matrix_dim), jnp.float32)
    w1, b1, w2, b2 = init_params(k_p, matrix_dim)
    w1_full, b1_pad, w2_row, b2_s = prepare_params(matrix_dim, w1, b1, w2, b2)

    out = mlp_forward(sim_matrices, w1_full, b1_pad, w2_row, b2_s)
    out = jax.block_until_ready(out)

    ref = mlp_reference(sim_matrices, w1, b1, w2, b2)

    assert out.shape == (batch, 1), out.shape
    assert bool(jnp.all(jnp.isfinite(out)))
    assert bool(jnp.all((out >= 0.0) & (out <= 1.0)))          # sigmoid range
    # bf16 matmul inputs -> loosened tolerance vs the f32 reference.
    assert bool(jnp.allclose(out, ref, atol=1e-2, rtol=1e-2))
    print("KERNEL_OK")
</pallas_src>

<mosaic_0001>
module attributes {stable_mosaic.version = 11 : i64} {
  func.func @mlp_kernel(%arg0: i32, %arg1: memref<128x256xbf16, #tpu.memory_space<vmem>>, %arg2: memref<256x128xbf16, #tpu.memory_space<vmem>>, %arg3: memref<1x128xf32, #tpu.memory_space<vmem>>, %arg4: memref<1x128xf32, #tpu.memory_space<vmem>>, %arg5: memref<1x1xf32, #tpu.memory_space<smem>>, %arg6: memref<1x128xf32, #tpu.memory_space<vmem>>) attributes {dimension_semantics = [#tpu.dimension_semantics<parallel>], iteration_bounds = array<i64: 1>, scalar_prefetch = 0 : i64, scratch_operands = 0 : i64, tpu.core_type = #tpu.core_type<tc>, window_params = [{transform_indices = @transform_0, window_bounds = array<i64: 128, 256>}, {pipeline_mode = #tpu.pipeline_mode<synchronous>, transform_indices = @transform_1, window_bounds = array<i64: 256, 128>}, {pipeline_mode = #tpu.pipeline_mode<synchronous>, transform_indices = @transform_2, window_bounds = array<i64: 1, 128>}, {pipeline_mode = #tpu.pipeline_mode<synchronous>, transform_indices = @transform_3, window_bounds = array<i64: 1, 128>}, {transform_indices = @transform_4, window_bounds = array<i64: 1, 1>}, {transform_indices = @transform_5, window_bounds = array<i64: 1, 128>}]} {
    %c0 = arith.constant 0 : index
    %c0_0 = arith.constant 0 : index
    %0 = vector.load %arg1[%c0, %c0_0] : memref<128x256xbf16, #tpu.memory_space<vmem>>, vector<128x256xbf16>
    %c0_1 = arith.constant 0 : index
    %c0_2 = arith.constant 0 : index
    %1 = vector.load %arg2[%c0_1, %c0_2] : memref<256x128xbf16, #tpu.memory_space<vmem>>, vector<256x128xbf16>
    %cst = arith.constant dense<0.000000e+00> : vector<128x128xf32>
    %2 = tpu.matmul %0, %1, %cst {dimension_numbers = #tpu.dot_dimension_numbers<[1], [0], [0], [1], [0, 0, 1, 1], [], []>} : vector<128x256xbf16>, vector<256x128xbf16>, vector<128x128xf32> -> vector<128x128xf32>
    %c0_3 = arith.constant 0 : index
    %c0_4 = arith.constant 0 : index
    %3 = vector.load %arg3[%c0_3, %c0_4] : memref<1x128xf32, #tpu.memory_space<vmem>>, vector<1x128xf32>
    %4 = vector.broadcast %3 : vector<1x128xf32> to vector<128x128xf32>
    %5 = arith.addf %2, %4 : vector<128x128xf32>
    %cst_5 = arith.constant 0.000000e+00 : f32
    %6 = vector.broadcast %cst_5 : f32 to vector<128x128xf32>
    %7 = arith.maximumf %5, %6 : vector<128x128xf32>
    %c0_6 = arith.constant 0 : index
    %c0_7 = arith.constant 0 : index
    %8 = vector.load %arg4[%c0_6, %c0_7] : memref<1x128xf32, #tpu.memory_space<vmem>>, vector<1x128xf32>
    %9 = vector.broadcast %8 : vector<1x128xf32> to vector<128x128xf32>
    %10 = arith.mulf %7, %9 : vector<128x128xf32>
    %11 = tpu.transpose %10, [1, 0] : vector<128x128xf32> -> vector<128x128xf32>
    %cst_8 = arith.constant dense<0.000000e+00> : vector<128xf32>
    %12 = vector.multi_reduction <add>, %11, %cst_8 [0] : vector<128x128xf32> to vector<128xf32>
    %13 = vector.shape_cast %12 : vector<128xf32> to vector<1x128xf32>
    %c0_9 = arith.constant 0 : index
    %c0_10 = arith.constant 0 : index
    %14 = memref.load %arg5[%c0_9, %c0_10] : memref<1x1xf32, #tpu.memory_space<smem>>
    %15 = vector.broadcast %14 : f32 to vector<1x128xf32>
    %16 = arith.addf %13, %15 : vector<1x128xf32>
    %17 = arith.negf %16 : vector<1x128xf32>
    %18 = math.exp %17 : vector<1x128xf32>
    %cst_11 = arith.constant 1.000000e+00 : f32
    %19 = vector.broadcast %cst_11 : f32 to vector<1x128xf32>
    %20 = arith.addf %19, %18 : vector<1x128xf32>
    %21 = arith.divf %19, %20 : vector<1x128xf32>
    %c0_12 = arith.constant 0 : index
    %c0_13 = arith.constant 0 : index
    %22 = vector.load %arg6[%c0_12, %c0_13] : memref<1x128xf32, #tpu.memory_space<vmem>>, vector<1x128xf32>
    tpu.vector_store %arg6[%c0_12, %c0_13], %21 {strides = array<i32>} : memref<1x128xf32, #tpu.memory_space<vmem>>, vector<1x128xf32>,
    return
  }
  func.func @transform_0(%arg0: i32) -> (i32, i32) {
    %c0_i32 = arith.constant 0 : i32
    %c0_i32_0 = arith.constant 0 : i32
    return %arg0, %c0_i32 : i32, i32
  }
  func.func @transform_1(%arg0: i32) -> (i32, i32) {
    %c0_i32 = arith.constant 0 : i32
    %c0_i32_0 = arith.constant 0 : i32
    %c0_i32_1 = arith.constant 0 : i32
    return %c0_i32, %c0_i32_0 : i32, i32
  }
  func.func @transform_2(%arg0: i32) -> (i32, i32) {
    %c0_i32 = arith.constant 0 : i32
    %c0_i32_0 = arith.constant 0 : i32
    %c0_i32_1 = arith.constant 0 : i32
    return %c0_i32, %c0_i32_0 : i32, i32
  }
  func.func @transform_3(%arg0: i32) -> (i32, i32) {
    %c0_i32 = arith.constant 0 : i32
    %c0_i32_0 = arith.constant 0 : i32
    %c0_i32_1 = arith.constant 0 : i32
    return %c0_i32, %c0_i32_0 : i32, i32
  }
  func.func @transform_4(%arg0: i32) -> (i32, i32) {
    %c0_i32 = arith.constant 0 : i32
    %c0_i32_0 = arith.constant 0 : i32
    %c0_i32_1 = arith.constant 0 : i32
    return %c0_i32, %c0_i32_0 : i32, i32
  }
  func.func @transform_5(%arg0: i32) -> (i32, i32) {
    %c0_i32 = arith.constant 0 : i32
    %c0_i32_0 = arith.constant 0 : i32
    return %arg0, %c0_i32 : i32, i32
  }
}

</mosaic_0001>

<llo_original>
// kernel: tpu_custom_call.1
$region0: #{tpu_custom_call.1}
  #allocation0 [shape = 'u32[]', space=smem, size = 0x4, offset = 0x4, fixed_abs, tag = 'smem constant byte address 0x4 - core index']
  #allocation1 [shape = 'u32[144,128]{1,0:T(1,128)}', space=vmem, size = 0x12000, scoped, tag = 'internal scratch']
  #allocation2 [shape = 'f32[1,1]{1,0:T(1,128)S(6)}', space=smem, size = 0x200, scoped, tag = 'scoped memory for tpu_custom_call.1']
  %s0 = inlined_call_operand.hbm [shape: bf16[128,256], index: 0, kind: input, shape index: {}]
  %s1 = inlined_call_operand.hbm [shape: bf16[256,128], index: 1, kind: input, shape index: {}]
  %s2 = inlined_call_operand.vmem [shape: f32[1,128], index: 2, kind: input, shape index: {}]
  %s3 = inlined_call_operand.vmem [shape: f32[1,128], index: 3, kind: input, shape index: {}]
  %s4 = inlined_call_operand.<no memory space> [shape: f32[1,1], index: 4, kind: input, shape index: {}]
  %s5 = inlined_call_operand.hbm [shape: f32[1,128], index: 5, kind: output, shape index: {}]
  %s6 = sld [smem:[#allocation0]]
  $region38: #{tpu_custom_call.1} parent=0
    _
  %s8 = ssub.s32 1, %s6
  %s9 = scalar_select 0, %s8, %s6
  %10 = sst [smem:[#allocation2]] %s4
  $region1: #{tpu_custom_call.1} parent=0
    #allocation3 [shape = 'u8[65536]{0}', space=vmem, size = 0x10000, scoped, tag = 'input window, operand 0, single buffered']
    #allocation4 [shape = 's32[1]{0}', space=sflag, size = 0x4, scoped, tag = 'scoped memory for tpu_custom_call.1']
    #allocation5 [shape = 's32[1]{0}', space=sflag, size = 0x4, scoped, tag = 'scoped memory for tpu_custom_call.1']
    #allocation6 [shape = 'u8[65536]{0}', space=vmem, size = 0x10000, scoped, tag = 'input window, operand 1, single buffered']
    #allocation7 [shape = 's32[1]{0}', space=sflag, size = 0x4, scoped, tag = 'scoped memory for tpu_custom_call.1']
    #allocation8 [shape = 'u8[512]{0}', space=vmem, size = 0x400, scoped, tag = 'output window, operand 0, single buffered']
    %11 = vsyncpa [#allocation4], 0
    %12 = vsyncpa [#allocation7], 0
    %13 = vsyncpa [#allocation5], 0
    // Predicated region
    $region2: #{tpu_custom_call.1} parent=1 // pred_check
      _
    $region3: #{tpu_custom_call.1} parent=1 // pred_check_branch
      %15 = sbr.rel (0) target = $region5
    $region4: #{tpu_custom_call.1} parent=1 // pred_region
      %s17 = ssub.s32 2048, 2048
      %18 = vsyncadd [#allocation4], %s17
      %s19 = sshll.u32 [#allocation3], 4
      %s20 = int_to_ptr.vmem [resolvable:$true] %s19
      %25 = dma.hbm_to_vmem [thread:$0]  %s0, 2048, %s20, [#allocation4], 128, 128, 8
    $region5: #{tpu_custom_call.1} parent=1 // pred_fallthru
      _
    // Predicated region
    $region6: #{tpu_custom_call.1} parent=1 // pred_check
      _
    $region7: #{tpu_custom_call.1} parent=1 // pred_check_branch
      %27 = sbr.rel (0) target = $region9
    $region8: #{tpu_custom_call.1} parent=1 // pred_region
      %s29 = ssub.s32 2048, 2048
      %30 = vsyncadd [#allocation7], %s29
      %s31 = sshll.u32 [#allocation6], 4
      %s32 = int_to_ptr.vmem [resolvable:$true] %s31
      %37 = dma.hbm_to_vmem [thread:$0]  %s1, 2048, %s32, [#allocation7], 64, 64, 4
    $region9: #{tpu_custom_call.1} parent=1 // pred_fallthru
      _
    // Predicated region
    $region10: #{tpu_custom_call.1} parent=1 // pred_check
      _
    $region11: #{tpu_custom_call.1} parent=1 // pred_check_branch
      %39 = sbr.rel (0) target = $region13
    $region12: #{tpu_custom_call.1} parent=1 // pred_region
      _
    $region13: #{tpu_custom_call.1} parent=1 // pred_fallthru
      _
    // Predicated region
    $region14: #{tpu_custom_call.1} parent=1 // pred_check
      _
    $region15: #{tpu_custom_call.1} parent=1 // pred_check_branch
      %41 = sbr.rel (0) target = $region17
    $region16: #{tpu_custom_call.1} parent=1 // pred_region
      _
    $region17: #{tpu_custom_call.1} parent=1 // pred_fallthru
      _
    // Predicated region
    $region18: #{tpu_custom_call.1} parent=1 // pred_check
      _
    $region19: #{tpu_custom_call.1} parent=1 // pred_check_branch
      %43 = sbr.rel (0) target = $region21
    $region20: #{tpu_custom_call.1} parent=1 // pred_region
      _
    $region21: #{tpu_custom_call.1} parent=1 // pred_fallthru
      _
    // Predicated region
    $region22: #{tpu_custom_call.1} parent=1 // pred_check
      _
    $region23: #{tpu_custom_call.1} parent=1 // pred_check_branch
      %45 = sbr.rel (0) target = $region25
    $region24: #{tpu_custom_call.1} parent=1 // pred_region
      %46 = dma.done [#allocation4], 2048
    $region25: #{tpu_custom_call.1} parent=1 // pred_fallthru
      _
    // Predicated region
    $region26: #{tpu_custom_call.1} parent=1 // pred_check
      _
    $region27: #{tpu_custom_call.1} parent=1 // pred_check_branch
      %48 = sbr.rel (0) target = $region29
    $region28: #{tpu_custom_call.1} parent=1 // pred_region
      %49 = dma.done [#allocation7], 2048
    $region29: #{tpu_custom_call.1} parent=1 // pred_fallthru
      _
    %v51 = vld [vmem:[#allocation3] sm:$0xff]
    %v52 = vld [vmem:[#allocation3 + $0x8] sm:$0xff]
    %v53 = vld [vmem:[#allocation3 + $0x10] sm:$0xff]
    %v54 = vld [vmem:[#allocation3 + $0x18] sm:$0xff]
    %v55 = vld [vmem:[#allocation3 + $0x20] sm:$0xff]
    %v56 = vld [vmem:[#allocation3 + $0x28] sm:$0xff]
    %v57 = vld [vmem:[#allocation3 + $0x30] sm:$0xff]
    %v58 = vld [vmem:[#allocation3 + $0x38] sm:$0xff]
    %v59 = vld [vmem:[#allocation3 + $0x40] sm:$0xff]
    %v60 = vld [vmem:[#allocation3 + $0x48] sm:$0xff]
    %v61 = vld [vmem:[#allocation3 + $0x50] sm:$0xff]
    %v62 = vld [vmem:[#allocation3 + $0x58] sm:$0xff]
    %v63 = vld [vmem:[#allocation3 + $0x60] sm:$0xff]
    %v64 = vld [vmem:[#allocation3 + $0x68] sm:$0xff]
    %v65 = vld [vmem:[#allocation3 + $0x70] sm:$0xff]
    %v66 = vld [vmem:[#allocation3 + $0x78] sm:$0xff]
    %v67 = vld [vmem:[#allocation6] sm:$0xf]
    %v68 = vld [vmem:[#allocation6 + $0x4] sm:$0xf]
    %v69 = vld [vmem:[#allocation6 + $0x8] sm:$0xf]
    %v70 = vld [vmem:[#allocation6 + $0xc] sm:$0xf]
    %v71 = vld [vmem:[#allocation6 + $0x10] sm:$0xf]
    %v72 = vld [vmem:[#allocation6 + $0x14] sm:$0xf]
    %v73 = vld [vmem:[#allocation6 + $0x18] sm:$0xf]
    %v74 = vld [vmem:[#allocation6 + $0x1c] sm:$0xf]
    %v75 = vld [vmem:[#allocation6 + $0x20] sm:$0xf]
    %v76 = vld [vmem:[#allocation6 + $0x24] sm:$0xf]
    %v77 = vld [vmem:[#allocation6 + $0x28] sm:$0xf]
    %v78 = vld [vmem:[#allocation6 + $0x2c] sm:$0xf]
    %v79 = vld [vmem:[#allocation6 + $0x30] sm:$0xf]
    %v80 = vld [vmem:[#allocation6 + $0x34] sm:$0xf]
    %v81 = vld [vmem:[#allocation6 + $0x38] sm:$0xf]
    %v82 = vld [vmem:[#allocation6 + $0x3c] sm:$0xf]
    %v83 = vld [vmem:[#allocation6 + $0x40] sm:$0xf]
    %v84 = vld [vmem:[#allocation6 + $0x44] sm:$0xf]
    %v85 = vld [vmem:[#allocation6 + $0x48] sm:$0xf]
    %v86 = vld [vmem:[#allocation6 + $0x4c] sm:$0xf]
    %v87 = vld [vmem:[#allocation6 + $0x50] sm:$0xf]
    %v88 = vld [vmem:[#allocation6 + $0x54] sm:$0xf]
    %v89 = vld [vmem:[#allocation6 + $0x58] sm:$0xf]
    %v90 = vld [vmem:[#allocation6 + $0x5c] sm:$0xf]
    %v91 = vld [vmem:[#allocation6 + $0x60] sm:$0xf]
    %v92 = vld [vmem:[#allocation6 + $0x64] sm:$0xf]
    %v93 = vld [vmem:[#allocation6 + $0x68] sm:$0xf]
    %v94 = vld [vmem:[#allocation6 + $0x6c] sm:$0xf]
    %v95 = vld [vmem:[#allocation6 + $0x70] sm:$0xf]
    %v96 = vld [vmem:[#allocation6 + $0x74] sm:$0xf]
    %v97 = vld [vmem:[#allocation6 + $0x78] sm:$0xf]
    %v98 = vld [vmem:[#allocation6 + $0x7c] sm:$0xf]
    %v99 = vld [vmem:[%s2] sm:$0x1]
    %v101 = vlaneseq
    %v102 = vshrl.u32 %v101, 7
    %v103 = vsub.s32 0, %v102
    %v104 = vrot.slane %v99, %v103
    %v122 = vunpack.c.l.b16 %v51
    %v123 = vunpack.c.h.b16 %v51
    %v124 = vunpack.c.l.b16 %v52
    %v125 = vunpack.c.h.b16 %v52
    %v126 = vunpack.c.l.b16 %v53
    %v127 = vunpack.c.h.b16 %v53
    %v128 = vunpack.c.l.b16 %v54
    %v129 = vunpack.c.h.b16 %v54
    %v130 = vunpack.c.l.b16 %v55
    %v131 = vunpack.c.h.b16 %v55
    %v132 = vunpack.c.l.b16 %v56
    %v133 = vunpack.c.h.b16 %v56
    %v134 = vunpack.c.l.b16 %v57
    %v135 = vunpack.c.h.b16 %v57
    %v136 = vunpack.c.l.b16 %v58
    %v137 = vunpack.c.h.b16 %v58
    %v138 = vunpack.c.l.b16 %v59
    %v139 = vunpack.c.h.b16 %v59
    %v140 = vunpack.c.l.b16 %v60
    %v141 = vunpack.c.h.b16 %v60
    %v142 = vunpack.c.l.b16 %v61
    %v143 = vunpack.c.h.b16 %v61
    %v144 = vunpack.c.l.b16 %v62
    %v145 = vunpack.c.h.b16 %v62
    %v146 = vunpack.c.l.b16 %v63
    %v147 = vunpack.c.h.b16 %v63
    %v148 = vunpack.c.l.b16 %v64
    %v149 = vunpack.c.h.b16 %v64
    %v150 = vunpack.c.l.b16 %v65
    %v151 = vunpack.c.h.b16 %v65
    %v152 = vunpack.c.l.b16 %v66
    %v153 = vunpack.c.h.b16 %v66
    %v154 = vpack.c.b16 %v124, %v122
    %v155 = vpack.c.b16 %v125, %v123
    %v156 = vpack.c.b16 %v128, %v126
    %v157 = vpack.c.b16 %v129, %v127
    %v158 = vpack.c.b16 %v132, %v130
    %v159 = vpack.c.b16 %v133, %v131
    %v160 = vpack.c.b16 %v136, %v134
    %v161 = vpack.c.b16 %v137, %v135
    %v162 = vpack.c.b16 %v140, %v138
    %v163 = vpack.c.b16 %v141, %v139
    %v164 = vpack.c.b16 %v144, %v142
    %v165 = vpack.c.b16 %v145, %v143
    %v166 = vpack.c.b16 %v148, %v146
    %v167 = vpack.c.b16 %v149, %v147
    %v168 = vpack.c.b16 %v152, %v150
    %v169 = vpack.c.b16 %v153, %v151
    %v218 = vunpack.c.l.b16 %v67
    %v219 = vunpack.c.l.b16 %v68
    %v220 = vunpack.c.l.b16 %v69
    %v221 = vunpack.c.l.b16 %v70
    %v222 = vunpack.c.l.b16 %v71
    %v223 = vunpack.c.l.b16 %v72
    %v224 = vunpack.c.l.b16 %v73
    %v225 = vunpack.c.l.b16 %v74
    %v226 = vunpack.c.l.b16 %v75
    %v227 = vunpack.c.l.b16 %v76
    %v228 = vunpack.c.l.b16 %v77
    %v229 = vunpack.c.l.b16 %v78
    %v230 = vunpack.c.l.b16 %v79
    %v231 = vunpack.c.l.b16 %v80
    %v232 = vunpack.c.l.b16 %v81
    %v233 = vunpack.c.l.b16 %v82
    %v234 = vunpack.c.l.b16 %v83
    %v235 = vunpack.c.l.b16 %v84
    %v236 = vunpack.c.l.b16 %v85
    %v237 = vunpack.c.l.b16 %v86
    %v238 = vunpack.c.l.b16 %v87
    %v239 = vunpack.c.l.b16 %v88
    %v240 = vunpack.c.l.b16 %v89
    %v241 = vunpack.c.l.b16 %v90
    %v242 = vunpack.c.l.b16 %v91
    %v243 = vunpack.c.l.b16 %v92
    %v244 = vunpack.c.l.b16 %v93
    %v245 = vunpack.c.l.b16 %v94
    %v246 = vunpack.c.l.b16 %v95
    %v247 = vunpack.c.l.b16 %v96
    %v248 = vunpack.c.l.b16 %v97
    %v249 = vunpack.c.l.b16 %v98
    %v250 = vpack.c.b16 %v219, %v218
    %v251 = vpack.c.b16 %v221, %v220
    %v252 = vpack.c.b16 %v223, %v222
    %v253 = vpack.c.b16 %v225, %v224
    %v254 = vpack.c.b16 %v227, %v226
    %v255 = vpack.c.b16 %v229, %v228
    %v256 = vpack.c.b16 %v231, %v230
    %v257 = vpack.c.b16 %v233, %v232
    %v258 = vpack.c.b16 %v235, %v234
    %v259 = vpack.c.b16 %v237, %v236
    %v260 = vpack.c.b16 %v239, %v238
    %v261 = vpack.c.b16 %v241, %v240
    %v262 = vpack.c.b16 %v243, %v242
    %v263 = vpack.c.b16 %v245, %v244
    %v264 = vpack.c.b16 %v247, %v246
    %v265 = vpack.c.b16 %v249, %v248
    %282 = vmatprep.subr.bf16.mxu0 0
    %283 = vmatpush1.bf16.msra.mxu0 %v250
    %284 = vmatprep.subr.bf16.mxu0 0
    %285 = vmatpush1.bf16.msra.mxu0 %v251
    %286 = vmatprep.subr.bf16.mxu0 0
    %287 = vmatpush1.bf16.msra.mxu0 %v252
    %288 = vmatprep.subr.bf16.mxu0 0
    %289 = vmatpush1.bf16.msra.mxu0 %v253
    %290 = vmatprep.subr.bf16.mxu0 0
    %291 = vmatpush1.bf16.msra.mxu0 %v254
    %292 = vmatprep.subr.bf16.mxu0 0
    %293 = vmatpush1.bf16.msra.mxu0 %v255
    %294 = vmatprep.subr.bf16.mxu0 0
    %295 = vmatpush1.bf16.msra.mxu0 %v256
    %296 = vmatprep.subr.bf16.mxu0 0
    %297 = vmatpush1.bf16.msra.mxu0 %v257
    %298 = vmatprep.subr.bf16.mxu0 0
    %299 = vmatpush1.bf16.msra.mxu0 %v258
    %300 = vmatprep.subr.bf16.mxu0 0
    %301 = vmatpush1.bf16.msra.mxu0 %v259
    %302 = vmatprep.subr.bf16.mxu0 0
    %303 = vmatpush1.bf16.msra.mxu0 %v260
    %304 = vmatprep.subr.bf16.mxu0 0
    %305 = vmatpush1.bf16.msra.mxu0 %v261
    %306 = vmatprep.subr.bf16.mxu0 0
    %307 = vmatpush1.bf16.msra.mxu0 %v262
    %308 = vmatprep.subr.bf16.mxu0 0
    %309 = vmatpush1.bf16.msra.mxu0 %v263
    %310 = vmatprep.subr.bf16.mxu0 0
    %311 = vmatpush1.bf16.msra.mxu0 %v264
    %312 = vmatprep.subr.bf16.mxu0 0
    %313 = vmatpush1.bf16.msra.mxu0 %v265
    %314 = vmatprep.mubr.bf16.mxu0 %v155
    %315 = vmatmul.mubr.bf16.gmra.mrb[0].mxu0 %v154
    %v316 = vpop.f32.mrb[0].mxu0
    %v317 = vadd.f32 %v104, %v316
    %v318 = vpop.f32.mrb[0].mxu0
    %v319 = vpop.f32.mrb[0].mxu0
    %v320 = vadd.f32 %v104, %v319
    %v321 = vpop.f32.mrb[0].mxu0
    %322 = vmatprep.mubr.bf16.mxu0 %v157
    %323 = vmatmul.mubr.bf16.gmra.mrb[0].mxu0 %v156
    %v324 = vpop.f32.mrb[0].mxu0
    %v325 = vadd.f32 %v104, %v324
    %v326 = vpop.f32.mrb[0].mxu0
    %v327 = vpop.f32.mrb[0].mxu0
    %v328 = vadd.f32 %v104, %v327
    %v329 = vpop.f32.mrb[0].mxu0
    %330 = vmatprep.mubr.bf16.mxu0 %v159
    %331 = vmatmul.mubr.bf16.gmra.mrb[0].mxu0 %v158
    %v332 = vpop.f32.mrb[0].mxu0
    %v333 = vadd.f32 %v104, %v332
    %v334 = vpop.f32.mrb[0].mxu0
    %v335 = vpop.f32.mrb[0].mxu0
    %v336 = vadd.f32 %v104, %v335
    %v337 = vpop.f32.mrb[0].mxu0
    %338 = vmatprep.mubr.bf16.mxu0 %v161
    %339 = vmatmul.mubr.bf16.gmra.mrb[0].mxu0 %v160
    %v340 = vpop.f32.mrb[0].mxu0
    %v341 = vadd.f32 %v104, %v340
    %v342 = vpop.f32.mrb[0].mxu0
    %v343 = vpop.f32.mrb[0].mxu0
    %v344 = vadd.f32 %v104, %v343
    %v345 = vpop.f32.mrb[0].mxu0
    %346 = vmatprep.mubr.bf16.mxu0 %v163
    %347 = vmatmul.mubr.bf16.gmra.mrb[0].mxu0 %v162
    %v348 = vpop.f32.mrb[0].mxu0
    %v349 = vadd.f32 %v104, %v348
    %v350 = vpop.f32.mrb[0].mxu0
    %v351 = vpop.f32.mrb[0].mxu0
    %v352 = vadd.f32 %v104, %v351
    %v353 = vpop.f32.mrb[0].mxu0
    %354 = vmatprep.mubr.bf16.mxu0 %v165
    %355 = vmatmul.mubr.bf16.gmra.mrb[0].mxu0 %v164
    %v356 = vpop.f32.mrb[0].mxu0
    %v357 = vadd.f32 %v104, %v356
    %v358 = vpop.f32.mrb[0].mxu0
    %v359 = vpop.f32.mrb[0].mxu0
    %v360 = vadd.f32 %v104, %v359
    %v361 = vpop.f32.mrb[0].mxu0
    %362 = vmatprep.mubr.bf16.mxu0 %v167
    %363 = vmatmul.mubr.bf16.gmra.mrb[0].mxu0 %v166
    %v364 = vpop.f32.mrb[0].mxu0
    %v365 = vadd.f32 %v104, %v364
    %v366 = vpop.f32.mrb[0].mxu0
    %v367 = vpop.f32.mrb[0].mxu0
    %v368 = vadd.f32 %v104, %v367
    %v369 = vpop.f32.mrb[0].mxu0
    %370 = vmatprep.mubr.bf16.mxu0 %v169
    %371 = vmatmul.mubr.bf16.gmra.mrb[0].mxu0 %v168
    %v372 = vpop.f32.mrb[0].mxu0
    %v373 = vadd.f32 %v104, %v372
    %v374 = vpop.f32.mrb[0].mxu0
    %v375 = vpop.f32.mrb[0].mxu0
    %v376 = vadd.f32 %v104, %v375
    %v377 = vpop.f32.mrb[0].mxu0
    %378 = vdwg.mxu0
    %v379 = vmax.f32 %v317, 0.0
    %v380 = vmax.f32 %v320, 0.0
    %v381 = vmax.f32 %v325, 0.0
    %v382 = vmax.f32 %v328, 0.0
    %v383 = vmax.f32 %v333, 0.0
    %v384 = vmax.f32 %v336, 0.0
    %v385 = vmax.f32 %v341, 0.0
    %v386 = vmax.f32 %v344, 0.0
    %v387 = vmax.f32 %v349, 0.0
    %v388 = vmax.f32 %v352, 0.0
    %v389 = vmax.f32 %v357, 0.0
    %v390 = vmax.f32 %v360, 0.0
    %v391 = vmax.f32 %v365, 0.0
    %v392 = vmax.f32 %v368, 0.0
    %v393 = vmax.f32 %v373, 0.0
    %v394 = vmax.f32 %v376, 0.0
    %v395 = vld [vmem:[%s3] sm:$0x1]
    %v397 = vlaneseq
    %v398 = vshrl.u32 %v397, 7
    %v399 = vsub.s32 0, %v398
    %v400 = vrot.slane %v395, %v399
    %v402 = vmul.f32 %v379, %v400
    %v403 = vmul.f32 %v380, %v400
    %v404 = vmul.f32 %v381, %v400
    %v405 = vmul.f32 %v382, %v400
    %v406 = vmul.f32 %v383, %v400
    %v407 = vmul.f32 %v384, %v400
    %v408 = vmul.f32 %v385, %v400
    %v409 = vmul.f32 %v386, %v400
    %v410 = vmul.f32 %v387, %v400
    %v411 = vmul.f32 %v388, %v400
    %v412 = vmul.f32 %v389, %v400
    %v413 = vmul.f32 %v390, %v400
    %v414 = vmul.f32 %v391, %v400
    %v415 = vmul.f32 %v392, %v400
    %v416 = vmul.f32 %v393, %v400
    %v417 = vmul.f32 %v394, %v400
    %418 = vxpose.xlu0.b32.start [1/16] %v402, 128
    %419 = vxpose.xlu0.b32.cont [2/16] %v403, 128
    %420 = vxpose.xlu0.b32.cont [3/16] %v404, 128
    %421 = vxpose.xlu0.b32.cont [4/16] %v405, 128
    %422 = vxpose.xlu0.b32.cont [5/16] %v406, 128
    %423 = vxpose.xlu0.b32.cont [6/16] %v407, 128
    %424 = vxpose.xlu0.b32.cont [7/16] %v408, 128
    %425 = vxpose.xlu0.b32.cont [8/16] %v409, 128
    %426 = vxpose.xlu0.b32.cont [9/16] %v410, 128
    %427 = vxpose.xlu0.b32.cont [10/16] %v411, 128
    %428 = vxpose.xlu0.b32.cont [11/16] %v412, 128
    %429 = vxpose.xlu0.b32.cont [12/16] %v413, 128
    %430 = vxpose.xlu0.b32.cont [13/16] %v414, 128
    %431 = vxpose.xlu0.b32.cont [14/16] %v415, 128
    %432 = vxpose.xlu0.b32.cont [15/16] %v416, 128
    %433 = vxpose.xlu0.b32.end [16/16] %v417, 128
    %v434 = vpop.trf.xlu0
    %v435 = vpop.trf.xlu0
    %v436 = vpop.trf.xlu0
    %v437 = vpop.trf.xlu0
    %v438 = vpop.trf.xlu0
    %v439 = vpop.trf.xlu0
    %v440 = vpop.trf.xlu0
    %v441 = vpop.trf.xlu0
    %v442 = vpop.trf.xlu0
    %v443 = vpop.trf.xlu0
    %v444 = vpop.trf.xlu0
    %v445 = vpop.trf.xlu0
    %v446 = vpop.trf.xlu0
    %v447 = vpop.trf.xlu0
    %v448 = vpop.trf.xlu0
    %v449 = vpop.trf.xlu0
    %v450 = vadd.f32 %v434, %v435
    %v451 = vadd.f32 %v450, %v436
    %v452 = vadd.f32 %v451, %v437
    %v453 = vadd.f32 %v452, %v438
    %v454 = vadd.f32 %v453, %v439
    %v455 = vadd.f32 %v454, %v440
    %v456 = vadd.f32 %v455, %v441
    %v457 = vadd.f32 %v456, %v442
    %v458 = vadd.f32 %v457, %v443
    %v459 = vadd.f32 %v458, %v444
    %v460 = vadd.f32 %v459, %v445
    %v461 = vadd.f32 %v460, %v446
    %v462 = vadd.f32 %v461, %v447
    %v463 = vadd.f32 %v462, %v448
    %v464 = vadd.f32 %v463, %v449
    %v465 = vrot.slane %v464, 4
    %v466 = vadd.f32 %v464, %v465
    %v467 = vrot.slane %v466, 2
    %v468 = vadd.f32 %v466, %v467
    %v469 = vrot.slane %v468, 1
    %v470 = vadd.f32 %v468, %v469
    %s471 = sld [smem:[#allocation2]]
    %v472 = vstv %s471
    %v473 = vadd.f32 %v470, %v472
    %v474 = vxor.u32 %v473, 2147483648
    %v475 = vmul.f32 %v474, 1.442695
    %v476 = vpow.pop %v475
    %v477 = vadd.f32 %v476, 1.0
    %v478 = vrcp.pop %v477
    %v479 = vmul.f32 1.0, %v478
    %480 = vst [vmem:[#allocation8] sm:$0x1] %v479
    // Predicated region
    $region30: #{tpu_custom_call.1} parent=1 // pred_check
      _
    $region31: #{tpu_custom_call.1} parent=1 // pred_check_branch
      %482 = sbr.rel (0) target = $region33
    $region32: #{tpu_custom_call.1} parent=1 // pred_region
      %s484 = ssub.s32 16, 16
      %485 = vsyncadd [#allocation5], %s484
      %s487 = sshll.u32 [#allocation8], 4
      %s488 = int_to_ptr.vmem [resolvable:$true] %s487
      %490 = dma.vmem_to_hbm [thread:$0]  %s488, 16, %s5, [#allocation5]
    $region33: #{tpu_custom_call.1} parent=1 // pred_fallthru
      _
    // Predicated region
    $region34: #{tpu_custom_call.1} parent=1 // pred_check
      _
    $region35: #{tpu_custom_call.1} parent=1 // pred_check_branch
      %492 = sbr.rel (0) target = $region37
    $region36: #{tpu_custom_call.1} parent=1 // pred_region
      %493 = dma.done [#allocation5], 16
    $region37: #{tpu_custom_call.1} parent=1 // pred_fallthru
      _
    %494 = vsyncpa [#allocation4], 1
    %495 = vsyncpa [#allocation7], 1
    %496 = vsyncpa [#allocation5], 1

</llo_original>
